<compile_context>
chip_gen: v6e
topology: v6e:2x2x1
jax: 0.10.0
libtpu: 0.0.40
codegen_flags: <defaults>
</compile_context>

<pallas_src>
import math

import jax
import jax.numpy as jnp
from jax import lax
from jax.experimental import pallas as pl
from jax.experimental.pallas import tpu as pltpu

_INV_SQRT2 = 1.0 / math.sqrt(2.0)


def _round_up(x, m):
    return ((x + m - 1) // m) * m


def _intermediate_kernel(x_ref, w_ref, b_ref, o_ref):
    # x_ref: (tm, K) activations
    # w_ref: (tn, K) weight rows (nn.Linear layout; MXU consumes it transposed)
    # b_ref: (1, tn) f32 bias
    # o_ref: (tm, tn) output
    y = lax.dot_general(
        x_ref[...], w_ref[...],
        dimension_numbers=(((1,), (1,)), ((), ())),   # x @ w.T
        preferred_element_type=jnp.float32,
    )
    y = y + b_ref[...]                                # bias already f32 (precast in wrapper)
    g = y * 0.5 * (1.0 + lax.erf(y * _INV_SQRT2))     # exact erf-gelu, f32 math
    o_ref[...] = g.astype(o_ref.dtype)


def super_bert_intermediate(hidden_states, super_weight, super_bias,
                            sample_embed_dim, intermediate_size, *,
                            tm=256, tn=512):
    """hidden_states: [B, S, sample_embed_dim]
       super_weight : [super_intermediate, super_hidden]   (PyTorch nn.Linear layout)
       super_bias   : [super_intermediate]
       tm, tn       : row / column tile sizes (sweep parameters; tm multiple of 8
                      -- ideally 128/256 --, tn multiple of 128).
    """
    B, S, K = hidden_states.shape
    assert K == sample_embed_dim, "input feature dim must equal sample_embed_dim"

    # --- glue: sample the super-net parameters (plain JAX slicing, no transpose) ---
    w_nk = super_weight[:intermediate_size, :sample_embed_dim]     # (N, K)
    b_n = super_bias[:intermediate_size].astype(jnp.float32)       # (N,) precast to f32

    M = B * S
    N = intermediate_size

    # Lane-dense output: pad N up to a multiple of 128 (zero weight rows -> gelu(0)=0,
    # sliced off below). For production sizes (N % 128 == 0) this is a no-op.
    N_p = _round_up(N, 128)
    if N_p != N:
        w_nk = jnp.pad(w_nk, ((0, N_p - N), (0, 0)))
        b_n = jnp.pad(b_n, (0, N_p - N))
    b_2d = b_n.reshape(1, N_p)

    x2d = hidden_states.reshape(M, K)

    # Clamp tiles to the problem size (keeps block shapes legal for tiny shapes).
    tm_eff = min(tm, _round_up(M, 8))          # multiple of 8
    tn_eff = min(tn, N_p)                      # multiple of 128

    grid = (pl.cdiv(N_p, tn_eff), pl.cdiv(M, tm_eff))   # N tiles OUTER, M tiles INNER

    # Explicit VMEM budget (double-buffered tiles + headroom), sized for v7x's 64 MiB.
    act_bytes = jnp.dtype(hidden_states.dtype).itemsize
    tile_bytes = 2 * (tm_eff * K * act_bytes          # activation tile
                      + tn_eff * K * act_bytes        # weight tile
                      + tm_eff * tn_eff * act_bytes   # output tile
                      + tn_eff * 4)                   # bias tile (f32)
    vmem_limit = int(min(64 * 1024 * 1024, max(32 * 1024 * 1024, 3 * tile_bytes)))

    out2d = pl.pallas_call(
        _intermediate_kernel,
        out_shape=jax.ShapeDtypeStruct((M, N_p), hidden_states.dtype),
        grid_spec=pltpu.PrefetchScalarGridSpec(
            num_scalar_prefetch=0,
            grid=grid,
            in_specs=[
                pl.BlockSpec((tm_eff, K), lambda j, i: (i, 0)),    # activations (re-read per N tile)
                pl.BlockSpec((tn_eff, K), lambda j, i: (j, 0)),    # weight rows (resident per N tile)
                pl.BlockSpec((1, tn_eff), lambda j, i: (0, j)),    # bias slice
            ],
            out_specs=pl.BlockSpec((tm_eff, tn_eff), lambda j, i: (i, j)),
        ),
        compiler_params=pltpu.CompilerParams(
            dimension_semantics=("parallel", "parallel"),
            vmem_limit_bytes=vmem_limit,
        ),
    )(x2d, w_nk, b_2d)

    return out2d[:, :N].reshape(B, S, N)


def _xavier_uniform(key, shape, dtype=jnp.float32):
    # matches nn.init.xavier_uniform_ for a (fan_out, fan_in) Linear weight
    fan_out, fan_in = shape
    limit = math.sqrt(6.0 / (fan_in + fan_out))
    return jax.random.uniform(key, shape, dtype=dtype, minval=-limit, maxval=limit)


if __name__ == "__main__":
    # config: hidden_size (super) = 32, intermediate_size (super) = 64, hidden_act='gelu'
    super_hidden = 32
    super_intermediate = 64
    # sampled (sub-net) dims
    sample_embed_dim = 24
    intermediate_size = 48
    batch, seq = 2, 8

    key = jax.random.PRNGKey(0)
    k_x, k_w = jax.random.split(key)

    # Deterministic parameter init, mirroring SuperLinear._reset_parameters
    W = _xavier_uniform(k_w, (super_intermediate, super_hidden))   # (out, in)
    b = jnp.zeros((super_intermediate,), jnp.float32)              # constant 0.0

    x = jax.random.normal(k_x, (batch, seq, sample_embed_dim), jnp.float32)

    out = super_bert_intermediate(x, W, b, sample_embed_dim, intermediate_size)
    out = jax.block_until_ready(out)

    # reference check in plain JAX
    ref = x @ W[:intermediate_size, :sample_embed_dim].T + b[:intermediate_size]
    ref = ref * 0.5 * (1.0 + lax.erf(ref / math.sqrt(2.0)))
    assert out.shape == (batch, seq, intermediate_size)
    assert jnp.allclose(out, ref, atol=1e-5, rtol=1e-5)

    print("KERNEL_OK")
</pallas_src>

<mosaic_0001>
module attributes {stable_mosaic.version = 11 : i64} {
  func.func @_intermediate_kernel(%arg0: i32, %arg1: i32, %arg2: memref<16x24xf32, #tpu.memory_space<vmem>>, %arg3: memref<128x24xf32, #tpu.memory_space<vmem>>, %arg4: memref<1x128xf32, #tpu.memory_space<vmem>>, %arg5: memref<16x128xf32, #tpu.memory_space<vmem>>) attributes {dimension_semantics = [#tpu.dimension_semantics<parallel>, #tpu.dimension_semantics<parallel>], iteration_bounds = array<i64: 1, 1>, scalar_prefetch = 0 : i64, scratch_operands = 0 : i64, tpu.core_type = #tpu.core_type<tc>, window_params = [{transform_indices = @transform_0, window_bounds = array<i64: 16, 24>}, {transform_indices = @transform_1, window_bounds = array<i64: 128, 24>}, {transform_indices = @transform_2, window_bounds = array<i64: 1, 128>}, {transform_indices = @transform_3, window_bounds = array<i64: 16, 128>}]} {
    %c0 = arith.constant 0 : index
    %c0_0 = arith.constant 0 : index
    %0 = vector.load %arg2[%c0, %c0_0] : memref<16x24xf32, #tpu.memory_space<vmem>>, vector<16x24xf32>
    %c0_1 = arith.constant 0 : index
    %c0_2 = arith.constant 0 : index
    %1 = vector.load %arg3[%c0_1, %c0_2] : memref<128x24xf32, #tpu.memory_space<vmem>>, vector<128x24xf32>
    %cst = arith.constant dense<0.000000e+00> : vector<16x128xf32>
    %2 = tpu.matmul %0, %1, %cst {dimension_numbers = #tpu.dot_dimension_numbers<[1], [1], [0], [0], [0, 0, 1, 0], [], []>} : vector<16x24xf32>, vector<128x24xf32>, vector<16x128xf32> -> vector<16x128xf32>
    %c0_3 = arith.constant 0 : index
    %c0_4 = arith.constant 0 : index
    %3 = vector.load %arg4[%c0_3, %c0_4] : memref<1x128xf32, #tpu.memory_space<vmem>>, vector<1x128xf32>
    %4 = vector.broadcast %3 : vector<1x128xf32> to vector<16x128xf32>
    %5 = arith.addf %2, %4 : vector<16x128xf32>
    %cst_5 = arith.constant 5.000000e-01 : f32
    %6 = vector.broadcast %cst_5 : f32 to vector<16x128xf32>
    %7 = arith.mulf %5, %6 : vector<16x128xf32>
    %cst_6 = arith.constant 0.707106769 : f32
    %8 = vector.broadcast %cst_6 : f32 to vector<16x128xf32>
    %9 = arith.mulf %5, %8 : vector<16x128xf32>
    %10 = math.erf %9 : vector<16x128xf32>
    %cst_7 = arith.constant 1.000000e+00 : f32
    %11 = vector.broadcast %cst_7 : f32 to vector<16x128xf32>
    %12 = arith.addf %11, %10 : vector<16x128xf32>
    %13 = arith.mulf %7, %12 : vector<16x128xf32>
    %c0_8 = arith.constant 0 : index
    %c0_9 = arith.constant 0 : index
    %14 = vector.load %arg5[%c0_8, %c0_9] : memref<16x128xf32, #tpu.memory_space<vmem>>, vector<16x128xf32>
    tpu.vector_store %arg5[%c0_8, %c0_9], %13 {strides = array<i32>} : memref<16x128xf32, #tpu.memory_space<vmem>>, vector<16x128xf32>,
    return
  }
  func.func @transform_0(%arg0: i32, %arg1: i32) -> (i32, i32) {
    %c0_i32 = arith.constant 0 : i32
    %c0_i32_0 = arith.constant 0 : i32
    return %arg1, %c0_i32 : i32, i32
  }
  func.func @transform_1(%arg0: i32, %arg1: i32) -> (i32, i32) {
    %c0_i32 = arith.constant 0 : i32
    %c0_i32_0 = arith.constant 0 : i32
    return %arg0, %c0_i32 : i32, i32
  }
  func.func @transform_2(%arg0: i32, %arg1: i32) -> (i32, i32) {
    %c0_i32 = arith.constant 0 : i32
    %c0_i32_0 = arith.constant 0 : i32
    return %c0_i32, %arg0 : i32, i32
  }
  func.func @transform_3(%arg0: i32, %arg1: i32) -> (i32, i32) {
    %c0_i32 = arith.constant 0 : i32
    return %arg1, %arg0 : i32, i32
  }
}

</mosaic_0001>

<llo_original>
// kernel: tpu_custom_call.1
$region0: #{tpu_custom_call.1}
  #allocation0 [shape = 'u32[]', space=smem, size = 0x4, offset = 0x4, fixed_abs, tag = 'smem constant byte address 0x4 - core index']
  #allocation1 [shape = 'u32[144,128]{1,0:T(1,128)}', space=vmem, size = 0x12000, scoped, tag = 'internal scratch']
  %s0 = inlined_call_operand.vmem [shape: f32[16,24], index: 0, kind: input, shape index: {}]
  %s1 = inlined_call_operand.vmem [shape: f32[128,24], index: 1, kind: input, shape index: {}]
  %s2 = inlined_call_operand.vmem [shape: f32[1,128], index: 2, kind: input, shape index: {}]
  %s3 = inlined_call_operand.hbm [shape: f32[16,128], index: 3, kind: output, shape index: {}]
  %s4 = sld [smem:[#allocation0]]
  $region22: #{tpu_custom_call.1} parent=0
    _
  %s6 = ssub.s32 1, %s4
  %s7 = scalar_select 0, %s6, %s4
  $region1: #{tpu_custom_call.1} parent=0
    #allocation2 [shape = 'u8[8192]{0}', space=vmem, size = 0x2000, scoped, tag = 'output window, operand 0, single buffered']
    #allocation3 [shape = 's32[1]{0}', space=sflag, size = 0x4, scoped, tag = 'scoped memory for tpu_custom_call.1']
    %8 = vsyncpa [#allocation3], 0
    // Predicated region
    $region2: #{tpu_custom_call.1} parent=1 // pred_check
      _
    $region3: #{tpu_custom_call.1} parent=1 // pred_check_branch
      %10 = sbr.rel (0) target = $region5
    $region4: #{tpu_custom_call.1} parent=1 // pred_region
      _
    $region5: #{tpu_custom_call.1} parent=1 // pred_fallthru
      _
    // Predicated region
    $region6: #{tpu_custom_call.1} parent=1 // pred_check
      _
    $region7: #{tpu_custom_call.1} parent=1 // pred_check_branch
      %12 = sbr.rel (0) target = $region9
    $region8: #{tpu_custom_call.1} parent=1 // pred_region
      _
    $region9: #{tpu_custom_call.1} parent=1 // pred_fallthru
      _
    // Predicated region
    $region10: #{tpu_custom_call.1} parent=1 // pred_check
      _
    $region11: #{tpu_custom_call.1} parent=1 // pred_check_branch
      %14 = sbr.rel (0) target = $region13
    $region12: #{tpu_custom_call.1} parent=1 // pred_region
      _
    $region13: #{tpu_custom_call.1} parent=1 // pred_fallthru
      _
    %v15 = vld [vmem:[%s0] sm:$0xff]
    %v16 = vld [vmem:[%s0 + $0x8] sm:$0xff]
    %v17 = vld [vmem:[%s1] sm:$0xff]
    %v18 = vld [vmem:[%s1 + $0x8] sm:$0xff]
    %v19 = vld [vmem:[%s1 + $0x10] sm:$0xff]
    %v20 = vld [vmem:[%s1 + $0x18] sm:$0xff]
    %v21 = vld [vmem:[%s1 + $0x20] sm:$0xff]
    %v22 = vld [vmem:[%s1 + $0x28] sm:$0xff]
    %v23 = vld [vmem:[%s1 + $0x30] sm:$0xff]
    %v24 = vld [vmem:[%s1 + $0x38] sm:$0xff]
    %v25 = vld [vmem:[%s1 + $0x40] sm:$0xff]
    %v26 = vld [vmem:[%s1 + $0x48] sm:$0xff]
    %v27 = vld [vmem:[%s1 + $0x50] sm:$0xff]
    %v28 = vld [vmem:[%s1 + $0x58] sm:$0xff]
    %v29 = vld [vmem:[%s1 + $0x60] sm:$0xff]
    %v30 = vld [vmem:[%s1 + $0x68] sm:$0xff]
    %v31 = vld [vmem:[%s1 + $0x70] sm:$0xff]
    %v32 = vld [vmem:[%s1 + $0x78] sm:$0xff]
    %v33 = vld [vmem:[%s2] sm:$0x1]
    %v35 = vlaneseq
    %v36 = vshrl.u32 %v35, 7
    %v37 = vsub.s32 0, %v36
    %v38 = vrot.slane %v33, %v37
    %vm40 = vcmask 195584
    %v42 = vsel %vm40, %v15, 0
    %v45 = vsel %vm40, %v16, 0
    %v48 = vsel %vm40, %v17, 0
    %v51 = vsel %vm40, %v18, 0
    %v54 = vsel %vm40, %v19, 0
    %v57 = vsel %vm40, %v20, 0
    %v60 = vsel %vm40, %v21, 0
    %v63 = vsel %vm40, %v22, 0
    %v66 = vsel %vm40, %v23, 0
    %v69 = vsel %vm40, %v24, 0
    %v72 = vsel %vm40, %v25, 0
    %v75 = vsel %vm40, %v26, 0
    %v78 = vsel %vm40, %v27, 0
    %v81 = vsel %vm40, %v28, 0
    %v84 = vsel %vm40, %v29, 0
    %v87 = vsel %vm40, %v30, 0
    %v90 = vsel %vm40, %v31, 0
    %v93 = vsel %vm40, %v32, 0
    %95 = vmatprep.subr.mxu0 0.0
    %96 = vmatpush1.xpose.msra.mxu0 %v93
    %97 = vmatprep.subr.mxu0 0.0
    %98 = vmatpush1.xpose.msra.mxu0 %v90
    %99 = vmatprep.subr.mxu0 0.0
    %100 = vmatpush1.xpose.msra.mxu0 %v87
    %101 = vmatprep.subr.mxu0 0.0
    %102 = vmatpush1.xpose.msra.mxu0 %v84
    %103 = vmatprep.subr.mxu0 0.0
    %104 = vmatpush1.xpose.msra.mxu0 %v81
    %105 = vmatprep.subr.mxu0 0.0
    %106 = vmatpush1.xpose.msra.mxu0 %v78
    %107 = vmatprep.subr.mxu0 0.0
    %108 = vmatpush1.xpose.msra.mxu0 %v75
    %109 = vmatprep.subr.mxu0 0.0
    %110 = vmatpush1.xpose.msra.mxu0 %v72
    %111 = vmatprep.subr.mxu0 0.0
    %112 = vmatpush1.xpose.msra.mxu0 %v69
    %113 = vmatprep.subr.mxu0 0.0
    %114 = vmatpush1.xpose.msra.mxu0 %v66
    %115 = vmatprep.subr.mxu0 0.0
    %116 = vmatpush1.xpose.msra.mxu0 %v63
    %117 = vmatprep.subr.mxu0 0.0
    %118 = vmatpush1.xpose.msra.mxu0 %v60
    %119 = vmatprep.subr.mxu0 0.0
    %120 = vmatpush1.xpose.msra.mxu0 %v57
    %121 = vmatprep.subr.mxu0 0.0
    %122 = vmatpush1.xpose.msra.mxu0 %v54
    %123 = vmatprep.subr.mxu0 0.0
    %124 = vmatpush1.xpose.msra.mxu0 %v51
    %125 = vmatprep.subr.mxu0 0.0
    %126 = vmatpush1.xpose.msra.mxu0 %v48
    %127 = vmatprep.subr.mxu0 0.0
    %128 = vmatpush2.xpose.msra.mxu0 0.0
    %129 = vmatprep.subr.mxu0 0.0
    %130 = vmatpush2.xpose.msra.mxu0 0.0
    %131 = vmatprep.subr.mxu0 0.0
    %132 = vmatpush2.xpose.msra.mxu0 0.0
    %133 = vmatprep.subr.mxu0 0.0
    %134 = vmatpush2.xpose.msra.mxu0 0.0
    %135 = vmatprep.subr.mxu0 0.0
    %136 = vmatpush2.xpose.msra.mxu0 0.0
    %137 = vmatprep.subr.mxu0 0.0
    %138 = vmatpush2.xpose.msra.mxu0 0.0
    %139 = vmatprep.subr.mxu0 0.0
    %140 = vmatpush2.xpose.msra.mxu0 0.0
    %141 = vmatprep.subr.mxu0 0.0
    %142 = vmatpush2.xpose.msra.mxu0 0.0
    %143 = vmatprep.subr.mxu0 0.0
    %144 = vmatpush2.xpose.msra.mxu0 0.0
    %145 = vmatprep.subr.mxu0 0.0
    %146 = vmatpush2.xpose.msra.mxu0 0.0
    %147 = vmatprep.subr.mxu0 0.0
    %148 = vmatpush2.xpose.msra.mxu0 0.0
    %149 = vmatprep.subr.mxu0 0.0
    %150 = vmatpush2.xpose.msra.mxu0 0.0
    %151 = vmatprep.subr.mxu0 0.0
    %152 = vmatpush2.xpose.msra.mxu0 0.0
    %153 = vmatprep.subr.mxu0 0.0
    %154 = vmatpush2.xpose.msra.mxu0 0.0
    %155 = vmatprep.subr.mxu0 0.0
    %156 = vmatpush2.xpose.msra.mxu0 0.0
    %157 = vmatprep.subr.mxu0 0.0
    %158 = vmatpush2.xpose.msra.mxu0 0.0
    %159 = vmatprep.mubr.f32.mxu0 0.0
    %160 = vmatmul.mubr.f32.gmra.mxu0 %v42
    %v161 = vpop.f32.mrf.mxu0
    %v162 = vadd.f32 %v38, %v161
    %v163 = vpop.f32.mrf.mxu0
    %164 = vmatprep.mubr.f32.mxu0 0.0
    %165 = vmatmul.mubr.f32.gmra.mxu0 %v45
    %v166 = vpop.f32.mrf.mxu0
    %v167 = vadd.f32 %v38, %v166
    %v168 = vpop.f32.mrf.mxu0
    %169 = vdwg.mxu0
    %v170 = vmul.f32 %v162, 0.5
    %v171 = vmul.f32 %v167, 0.5
    %v172 = vmul.f32 %v162, 0.70710677
    %v173 = vmul.f32 %v167, 0.70710677
    %v174 = verf.f32.pop %v172
    %v175 = verf.f32.pop %v173
    %v176 = vadd.f32 %v174, 1.0
    %v177 = vadd.f32 %v175, 1.0
    %v178 = vmul.f32 %v170, %v176
    %v179 = vmul.f32 %v171, %v177
    %180 = vst [vmem:[#allocation2] sm:$0xff] %v178
    %181 = vst [vmem:[#allocation2 + $0x8] sm:$0xff] %v179
    // Predicated region
    $region14: #{tpu_custom_call.1} parent=1 // pred_check
      _
    $region15: #{tpu_custom_call.1} parent=1 // pred_check_branch
      %183 = sbr.rel (0) target = $region17
    $region16: #{tpu_custom_call.1} parent=1 // pred_region
      %s185 = ssub.s32 256, 256
      %186 = vsyncadd [#allocation3], %s185
      %s187 = sshll.u32 [#allocation2], 4
      %s188 = int_to_ptr.vmem [resolvable:$true] %s187
      %193 = dma.vmem_to_hbm [thread:$0]  %s188, 256, %s3, [#allocation3], 128, 128, 8
    $region17: #{tpu_custom_call.1} parent=1 // pred_fallthru
      _
    // Predicated region
    $region18: #{tpu_custom_call.1} parent=1 // pred_check
      _
    $region19: #{tpu_custom_call.1} parent=1 // pred_check_branch
      %195 = sbr.rel (0) target = $region21
    $region20: #{tpu_custom_call.1} parent=1 // pred_region
      %196 = dma.done [#allocation3], 256
    $region21: #{tpu_custom_call.1} parent=1 // pred_fallthru
      _
    %197 = vsyncpa [#allocation3], 1

</llo_original>
